<compile_context>
chip_gen: v7x
topology: tpu7x:2x2x1
jax: 0.10.0
libtpu: 0.0.40
codegen_flags: <defaults>
</compile_context>

<pallas_src>
import functools

import jax
import jax.numpy as jnp
from jax import lax
from jax.experimental import pallas as pl
from jax.experimental.pallas import tpu as pltpu


_VMEM_LIMIT_BYTES = 32 * 1024 * 1024   # explicit scoped limit (v5e default is only 16 MiB)
_VMEM_TILE_BUDGET = 24 * 1024 * 1024   # keep the pipelined footprint comfortably under it


def _linear_kernel(x_ref, w_ref, b_ref, o_ref, *, n_passthrough=0):
    # x_ref: (TN, K); w_ref: (K, M) already transposed by the wrapper -> plain x @ W on MXU.
    acc = lax.dot_general(
        x_ref[...], w_ref[...],
        dimension_numbers=(((1,), (0,)), ((), ())),
        preferred_element_type=jnp.float32)
    o_ref[...] = (acc + b_ref[...]).astype(o_ref.dtype)
    if n_passthrough:
        # Bit-exact coordinate pass-through: the identity block in the augmented weight is
        # only approximately exact under the MXU f32 decomposition, so copy the raw columns
        # over the matmul result (cheap masked store on lanes 0..n_passthrough-1).
        o_ref[:, :n_passthrough] = x_ref[:, :n_passthrough].astype(o_ref.dtype)


def _pick_row_tile(n, k, m, tile_n):
    """Largest legal row tile: multiple of 8, fits the VMEM budget, and >= 2 grid steps for
    large N so the node axis can shard across both TensorCores on v7x."""
    if n <= 256:
        return n  # full-extent block: always layout-legal, single grid step
    per_row = 4 * (2 * k + 2 * m)            # double-buffered x tile + out tile, f32
    fixed = 4 * (2 * k * m + 2 * m)          # weight + bias (conservatively double-counted)
    max_rows = max(8, (_VMEM_TILE_BUDGET - fixed) // per_row)
    max_rows = int(max_rows) // 8 * 8
    two_step = ((pl.cdiv(n, 2) + 7) // 8) * 8  # ensure at least 2 grid steps
    return max(8, min(tile_n, max_rows, two_step))


def pallas_linear(x, w_t, bias, *, n_passthrough=0, tile_n=2048):
    """y = x @ w_t + bias via a Pallas TPU kernel, tiled over rows.

    x:    [N, K]
    w_t:  [K, M]  (already transposed; the PyTorch nn.Linear weight is [M, K])
    bias: [M]
    """
    n, k = x.shape
    m = w_t.shape[1]
    b2 = bias.reshape(1, m)

    tile = _pick_row_tile(n, k, m, tile_n)
    grid = (pl.cdiv(n, tile),)

    cost = pl.CostEstimate(
        flops=2 * n * k * m,
        transcendentals=0,
        bytes_accessed=4 * (n * k + k * m + m + n * m))

    kernel = functools.partial(_linear_kernel, n_passthrough=n_passthrough)

    return pl.pallas_call(
        kernel,
        out_shape=jax.ShapeDtypeStruct((n, m), x.dtype),
        grid_spec=pltpu.PrefetchScalarGridSpec(
            num_scalar_prefetch=0,
            grid=grid,
            in_specs=[
                pl.BlockSpec((tile, k), lambda i: (i, 0)),
                # Constant block index -> weight/bias stay VMEM-resident across grid steps.
                pl.BlockSpec((k, m), lambda i: (0, 0)),
                pl.BlockSpec((1, m), lambda i: (0, 0)),
            ],
            out_specs=pl.BlockSpec((tile, m), lambda i: (i, 0)),
        ),
        compiler_params=pltpu.CompilerParams(
            dimension_semantics=("parallel",),
            vmem_limit_bytes=_VMEM_LIMIT_BYTES),
        cost_estimate=cost,
    )(x, w_t, b2)


def pyg_linear_pass(h, weight, bias, *, feats_appended_to_coords=False,
                    return_coords_and_edges=False, coord=None, edge_attr=None,
                    edge_messages=None, tile_n=2048):
    """Forward pass of PygLinearPass with an nn.Linear as the wrapped module."""
    f_out, f_in = weight.shape
    dt = h.dtype
    if feats_appended_to_coords:
        # Fuse the coordinate pass-through into the single matmul instead of slice + concat
        # (each a full extra HBM pass): augmented, PRE-TRANSPOSED weight [3+F_in, 3+F_out]
        # with an identity block over the first 3 rows/cols and a zero-padded bias, so
        #   h @ W_aug + b_aug == hstack([h[:, :3], h[:, 3:] @ W.T + b]).
        # The kernel then overwrites the first 3 output columns with the raw inputs so the
        # coordinate columns are bit-exact.
        w_t = jnp.zeros((3 + f_in, 3 + f_out), dtype=dt)
        w_t = w_t.at[:3, :3].set(jnp.eye(3, dtype=dt))
        w_t = w_t.at[3:, 3:].set(weight.astype(dt).T)
        b_aug = jnp.concatenate([jnp.zeros((3,), dtype=dt), bias.astype(dt)])
        res = pallas_linear(h, w_t, b_aug, n_passthrough=3, tile_n=tile_n)
    else:
        res = pallas_linear(h, weight.astype(dt).T, bias.astype(dt), tile_n=tile_n)
    if return_coords_and_edges:
        return res, coord, edge_attr, edge_messages
    return res


if __name__ == "__main__":
    key = jax.random.PRNGKey(0)
    k_h, k_w, k_b, k_c, k_e, k_h2 = jax.random.split(key, 6)

    N = 64          # number of nodes/points
    F_IN = 32       # wrapped linear in_features
    F_OUT = 32      # wrapped linear out_features
    E = 16          # number of edges (pass-through only)

    # h includes coordinates in the first three columns (feats_appended_to_coords=True)
    h = jax.random.normal(k_h, (N, 3 + F_IN), dtype=jnp.float32)
    weight = (jax.random.normal(k_w, (F_OUT, F_IN), dtype=jnp.float32)
              * (1.0 / jnp.sqrt(F_IN)))
    bias = jax.random.normal(k_b, (F_OUT,), dtype=jnp.float32) * 0.01
    coord = jax.random.normal(k_c, (N, 3), dtype=jnp.float32)
    edge_attr = jax.random.normal(k_e, (E, 4), dtype=jnp.float32)

    fwd = jax.jit(functools.partial(
        pyg_linear_pass,
        feats_appended_to_coords=True,
        return_coords_and_edges=True,
    ))
    res, out_coord, out_edge_attr, out_edge_msgs = fwd(
        h, weight, bias, coord=coord, edge_attr=edge_attr, edge_messages=None)
    jax.block_until_ready(res)

    # Reference check (pure JAX) — same semantics as the PyTorch module.
    ref = jnp.concatenate([h[:, :3], h[:, 3:] @ weight.T + bias], axis=1)
    assert res.shape == (N, 3 + F_OUT)
    assert jnp.allclose(res, ref, atol=1e-5, rtol=1e-5)
    assert jnp.array_equal(res[:, :3], h[:, :3])   # bit-exact coordinate pass-through
    assert jnp.array_equal(out_coord, coord)
    assert jnp.array_equal(out_edge_attr, edge_attr)
    assert out_edge_msgs is None

    # Ragged, multi-step grid path: N=500 exercises the no-pad/no-slice partial last block
    # and the >=2-parallel-steps tiling (tile = 256, grid = 2).
    N2 = 500
    h2 = jax.random.normal(k_h2, (N2, 3 + F_IN), dtype=jnp.float32)
    res2 = jax.jit(functools.partial(pyg_linear_pass,
                                     feats_appended_to_coords=True))(h2, weight, bias)
    jax.block_until_ready(res2)
    ref2 = jnp.concatenate([h2[:, :3], h2[:, 3:] @ weight.T + bias], axis=1)
    assert res2.shape == (N2, 3 + F_OUT)
    assert jnp.allclose(res2, ref2, atol=1e-5, rtol=1e-5)
    assert jnp.array_equal(res2[:, :3], h2[:, :3])

    # Plain (no coords) path.
    res3 = jax.jit(pyg_linear_pass)(h[:, 3:], weight, bias)
    jax.block_until_ready(res3)
    assert jnp.allclose(res3, h[:, 3:] @ weight.T + bias, atol=1e-5, rtol=1e-5)

    print("KERNEL_OK")
</pallas_src>

<mosaic_0001>
module attributes {stable_mosaic.version = 11 : i64} {
  func.func @_linear_kernel(%arg0: i32, %arg1: memref<64x35xf32, #tpu.memory_space<vmem>>, %arg2: memref<35x35xf32, #tpu.memory_space<vmem>>, %arg3: memref<1x35xf32, #tpu.memory_space<vmem>>, %arg4: memref<64x35xf32, #tpu.memory_space<vmem>>) attributes {dimension_semantics = [#tpu.dimension_semantics<parallel>], iteration_bounds = array<i64: 1>, scalar_prefetch = 0 : i64, scratch_operands = 0 : i64, tpu.core_type = #tpu.core_type<tc>, window_params = [{transform_indices = @transform_0, window_bounds = array<i64: 64, 35>}, {pipeline_mode = #tpu.pipeline_mode<synchronous>, transform_indices = @transform_1, window_bounds = array<i64: 35, 35>}, {pipeline_mode = #tpu.pipeline_mode<synchronous>, transform_indices = @transform_2, window_bounds = array<i64: 1, 35>}, {transform_indices = @transform_3, window_bounds = array<i64: 64, 35>}]} {
    %c0 = arith.constant 0 : index
    %c0_0 = arith.constant 0 : index
    %0 = vector.load %arg1[%c0, %c0_0] : memref<64x35xf32, #tpu.memory_space<vmem>>, vector<64x35xf32>
    %c0_1 = arith.constant 0 : index
    %c0_2 = arith.constant 0 : index
    %1 = vector.load %arg2[%c0_1, %c0_2] : memref<35x35xf32, #tpu.memory_space<vmem>>, vector<35x35xf32>
    %cst = arith.constant dense<0.000000e+00> : vector<64x35xf32>
    %2 = tpu.matmul %0, %1, %cst {dimension_numbers = #tpu.dot_dimension_numbers<[1], [0], [0], [1], [0, 0, 1, 1], [], []>} : vector<64x35xf32>, vector<35x35xf32>, vector<64x35xf32> -> vector<64x35xf32>
    %c0_3 = arith.constant 0 : index
    %c0_4 = arith.constant 0 : index
    %3 = vector.load %arg3[%c0_3, %c0_4] : memref<1x35xf32, #tpu.memory_space<vmem>>, vector<1x35xf32>
    %4 = vector.broadcast %3 : vector<1x35xf32> to vector<64x35xf32>
    %5 = arith.addf %2, %4 : vector<64x35xf32>
    %c0_5 = arith.constant 0 : index
    %c0_6 = arith.constant 0 : index
    %6 = vector.load %arg4[%c0_5, %c0_6] : memref<64x35xf32, #tpu.memory_space<vmem>>, vector<64x35xf32>
    tpu.vector_store %arg4[%c0_5, %c0_6], %5 {strides = array<i32>} : memref<64x35xf32, #tpu.memory_space<vmem>>, vector<64x35xf32>,
    %c0_7 = arith.constant 0 : index
    %c0_8 = arith.constant 0 : index
    %7 = vector.load %arg1[%c0_7, %c0_8] : memref<64x35xf32, #tpu.memory_space<vmem>>, vector<64x3xf32>
    %c0_9 = arith.constant 0 : index
    %c0_10 = arith.constant 0 : index
    %8 = vector.load %arg4[%c0_9, %c0_10] : memref<64x35xf32, #tpu.memory_space<vmem>>, vector<64x3xf32>
    tpu.vector_store %arg4[%c0_9, %c0_10], %7 {strides = array<i32>} : memref<64x35xf32, #tpu.memory_space<vmem>>, vector<64x3xf32>,
    return
  }
  func.func @transform_0(%arg0: i32) -> (i32, i32) {
    %c0_i32 = arith.constant 0 : i32
    %c0_i32_0 = arith.constant 0 : i32
    return %arg0, %c0_i32 : i32, i32
  }
  func.func @transform_1(%arg0: i32) -> (i32, i32) {
    %c0_i32 = arith.constant 0 : i32
    %c0_i32_0 = arith.constant 0 : i32
    %c0_i32_1 = arith.constant 0 : i32
    return %c0_i32, %c0_i32_0 : i32, i32
  }
  func.func @transform_2(%arg0: i32) -> (i32, i32) {
    %c0_i32 = arith.constant 0 : i32
    %c0_i32_0 = arith.constant 0 : i32
    %c0_i32_1 = arith.constant 0 : i32
    return %c0_i32, %c0_i32_0 : i32, i32
  }
  func.func @transform_3(%arg0: i32) -> (i32, i32) {
    %c0_i32 = arith.constant 0 : i32
    %c0_i32_0 = arith.constant 0 : i32
    return %arg0, %c0_i32 : i32, i32
  }
}

</mosaic_0001>

<llo_original>
// kernel: pyg_linear_pass.1
$region0: #{pyg_linear_pass.1}
  #allocation0 [shape = 'u32[]', space=smem, size = 0x4, offset = 0x4, fixed_abs, tag = 'smem constant byte address 0x4 - core index']
  #allocation1 [shape = 'u32[144,128]{1,0:T(1,128)}', space=vmem, size = 0x12000, scoped, tag = 'internal scratch']
  %s0 = inlined_call_operand.vmem [shape: f32[64,35], index: 0, kind: input, shape index: {}]
  %s1 = inlined_call_operand.vmem [shape: f32[35,35], index: 1, kind: input, shape index: {}]
  %s2 = inlined_call_operand.vmem [shape: f32[1,35], index: 2, kind: input, shape index: {}]
  %s3 = inlined_call_operand.vmem [shape: f32[64,35], index: 3, kind: output, shape index: {}]
  %s4 = sld [smem:[#allocation0]]
  $region22: #{pyg_linear_pass.1} parent=0
    _
  %s6 = ssub.s32 1, %s4
  %s7 = scalar_select 0, %s6, %s4
  // Predicated region
  $region2: #{pyg_linear_pass.1} parent=0 // pred_check
    _
  $region3: #{pyg_linear_pass.1} parent=0 // pred_check_branch
    %9 = sbr.rel (0) target = $region5
  $region4: #{pyg_linear_pass.1} parent=0 // pred_region
    _
  $region5: #{pyg_linear_pass.1} parent=0 // pred_fallthru
    _
  // Predicated region
  $region6: #{pyg_linear_pass.1} parent=0 // pred_check
    _
  $region7: #{pyg_linear_pass.1} parent=0 // pred_check_branch
    %11 = sbr.rel (0) target = $region9
  $region8: #{pyg_linear_pass.1} parent=0 // pred_region
    _
  $region9: #{pyg_linear_pass.1} parent=0 // pred_fallthru
    _
  // Predicated region
  $region10: #{pyg_linear_pass.1} parent=0 // pred_check
    _
  $region11: #{pyg_linear_pass.1} parent=0 // pred_check_branch
    %13 = sbr.rel (0) target = $region13
  $region12: #{pyg_linear_pass.1} parent=0 // pred_region
    _
  $region13: #{pyg_linear_pass.1} parent=0 // pred_fallthru
    _
  %v14 = vld [vmem:[%s0] sm:$0xff]
  %v15 = vld [vmem:[%s0 + $0x8] sm:$0xff]
  %v16 = vld [vmem:[%s0 + $0x10] sm:$0xff]
  %v17 = vld [vmem:[%s0 + $0x18] sm:$0xff]
  %v18 = vld [vmem:[%s0 + $0x20] sm:$0xff]
  %v19 = vld [vmem:[%s0 + $0x28] sm:$0xff]
  %v20 = vld [vmem:[%s0 + $0x30] sm:$0xff]
  %v21 = vld [vmem:[%s0 + $0x38] sm:$0xff]
  %v22 = vld [vmem:[%s1] sm:$0xff]
  %v23 = vld [vmem:[%s1 + $0x8] sm:$0xff]
  %v24 = vld [vmem:[%s1 + $0x10] sm:$0xff]
  %v25 = vld [vmem:[%s1 + $0x18] sm:$0xff]
  %v26 = vld [vmem:[%s1 + $0x20] sm:$0x7]
  %v27 = vld [vmem:[%s2] sm:$0x1]
  %v29 = vlaneseq
  %v30 = vshrl.u32 %v29, 7
  %v31 = vsub.s32 0, %v30
  %v32 = vrot.slane %v27, %v31
  %vm34 = vcmask 285696
  %v36 = vsel %vm34, %v14, 0
  %v39 = vsel %vm34, %v15, 0
  %v42 = vsel %vm34, %v16, 0
  %v45 = vsel %vm34, %v17, 0
  %v48 = vsel %vm34, %v18, 0
  %v51 = vsel %vm34, %v19, 0
  %v54 = vsel %vm34, %v20, 0
  %v57 = vsel %vm34, %v21, 0
  %vm59 = vcmask 1042432
  %v61 = vsel %vm59, %v26, 0
  %63 = vmatprep.subr.mxu0 0.0
  %64 = vmatpush1.msra.mxu0 %v22
  %65 = vmatprep.subr.mxu0 0.0
  %66 = vmatpush1.msra.mxu0 %v23
  %67 = vmatprep.subr.mxu0 0.0
  %68 = vmatpush1.msra.mxu0 %v24
  %69 = vmatprep.subr.mxu0 0.0
  %70 = vmatpush1.msra.mxu0 %v25
  %71 = vmatprep.subr.mxu0 0.0
  %72 = vmatpush1.msra.mxu0 %v61
  %73 = vmatprep.subr.mxu0 0.0
  %74 = vmatpush1.msra.mxu0 0.0
  %75 = vmatprep.subr.mxu0 0.0
  %76 = vmatpush1.msra.mxu0 0.0
  %77 = vmatprep.subr.mxu0 0.0
  %78 = vmatpush1.msra.mxu0 0.0
  %79 = vmatprep.subr.mxu0 0.0
  %80 = vmatpush1.msra.mxu0 0.0
  %81 = vmatprep.subr.mxu0 0.0
  %82 = vmatpush1.msra.mxu0 0.0
  %83 = vmatprep.subr.mxu0 0.0
  %84 = vmatpush1.msra.mxu0 0.0
  %85 = vmatprep.subr.mxu0 0.0
  %86 = vmatpush1.msra.mxu0 0.0
  %87 = vmatprep.subr.mxu0 0.0
  %88 = vmatpush1.msra.mxu0 0.0
  %89 = vmatprep.subr.mxu0 0.0
  %90 = vmatpush1.msra.mxu0 0.0
  %91 = vmatprep.subr.mxu0 0.0
  %92 = vmatpush1.msra.mxu0 0.0
  %93 = vmatprep.subr.mxu0 0.0
  %94 = vmatpush1.msra.mxu0 0.0
  %95 = vmatprep.subr.mxu0 0.0
  %96 = vmatpush1.msra.mxu0 0.0
  %97 = vmatprep.subr.mxu0 0.0
  %98 = vmatpush1.msra.mxu0 0.0
  %99 = vmatprep.subr.mxu0 0.0
  %100 = vmatpush1.msra.mxu0 0.0
  %101 = vmatprep.subr.mxu0 0.0
  %102 = vmatpush1.msra.mxu0 0.0
  %103 = vmatprep.subr.mxu0 0.0
  %104 = vmatpush1.msra.mxu0 0.0
  %105 = vmatprep.subr.mxu0 0.0
  %106 = vmatpush1.msra.mxu0 0.0
  %107 = vmatprep.subr.mxu0 0.0
  %108 = vmatpush1.msra.mxu0 0.0
  %109 = vmatprep.subr.mxu0 0.0
  %110 = vmatpush1.msra.mxu0 0.0
  %111 = vmatprep.subr.mxu0 0.0
  %112 = vmatpush1.msra.mxu0 0.0
  %113 = vmatprep.subr.mxu0 0.0
  %114 = vmatpush1.msra.mxu0 0.0
  %115 = vmatprep.subr.mxu0 0.0
  %116 = vmatpush1.msra.mxu0 0.0
  %117 = vmatprep.subr.mxu0 0.0
  %118 = vmatpush1.msra.mxu0 0.0
  %119 = vmatprep.subr.mxu0 0.0
  %120 = vmatpush1.msra.mxu0 0.0
  %121 = vmatprep.subr.mxu0 0.0
  %122 = vmatpush1.msra.mxu0 0.0
  %123 = vmatprep.subr.mxu0 0.0
  %124 = vmatpush1.msra.mxu0 0.0
  %125 = vmatprep.subr.mxu0 0.0
  %126 = vmatpush1.msra.mxu0 0.0
  %127 = vmatprep.mubr.f32.mxu0 0.0
  %128 = vmatmul.mubr.f32.gmra.mrb[0].mxu0 %v36
  %v129 = vpop.f32.mrb[0].mxu0
  %v130 = vadd.f32 %v32, %v129
  %v131 = vpop.f32.mrb[0].mxu0
  %132 = vmatprep.mubr.f32.mxu0 0.0
  %133 = vmatmul.mubr.f32.gmra.mrb[0].mxu0 %v39
  %v134 = vpop.f32.mrb[0].mxu0
  %v135 = vadd.f32 %v32, %v134
  %v136 = vpop.f32.mrb[0].mxu0
  %137 = vmatprep.mubr.f32.mxu0 0.0
  %138 = vmatmul.mubr.f32.gmra.mrb[0].mxu0 %v42
  %v139 = vpop.f32.mrb[0].mxu0
  %v140 = vadd.f32 %v32, %v139
  %v141 = vpop.f32.mrb[0].mxu0
  %142 = vmatprep.mubr.f32.mxu0 0.0
  %143 = vmatmul.mubr.f32.gmra.mrb[0].mxu0 %v45
  %v144 = vpop.f32.mrb[0].mxu0
  %v145 = vadd.f32 %v32, %v144
  %v146 = vpop.f32.mrb[0].mxu0
  %147 = vmatprep.mubr.f32.mxu0 0.0
  %148 = vmatmul.mubr.f32.gmra.mrb[0].mxu0 %v48
  %v149 = vpop.f32.mrb[0].mxu0
  %v150 = vadd.f32 %v32, %v149
  %v151 = vpop.f32.mrb[0].mxu0
  %152 = vmatprep.mubr.f32.mxu0 0.0
  %153 = vmatmul.mubr.f32.gmra.mrb[0].mxu0 %v51
  %v154 = vpop.f32.mrb[0].mxu0
  %v155 = vadd.f32 %v32, %v154
  %v156 = vpop.f32.mrb[0].mxu0
  %157 = vmatprep.mubr.f32.mxu0 0.0
  %158 = vmatmul.mubr.f32.gmra.mrb[0].mxu0 %v54
  %v159 = vpop.f32.mrb[0].mxu0
  %v160 = vadd.f32 %v32, %v159
  %v161 = vpop.f32.mrb[0].mxu0
  %162 = vmatprep.mubr.f32.mxu0 0.0
  %163 = vmatmul.mubr.f32.gmra.mrb[0].mxu0 %v57
  %v164 = vpop.f32.mrb[0].mxu0
  %v165 = vadd.f32 %v32, %v164
  %v166 = vpop.f32.mrb[0].mxu0
  %167 = vdwg.mxu0
  %168 = vst.msk [vmem:[%s3] sm:$0xff] %vm34, %v130
  %169 = vst.msk [vmem:[%s3 + $0x8] sm:$0xff] %vm34, %v135
  %170 = vst.msk [vmem:[%s3 + $0x10] sm:$0xff] %vm34, %v140
  %171 = vst.msk [vmem:[%s3 + $0x18] sm:$0xff] %vm34, %v145
  %172 = vst.msk [vmem:[%s3 + $0x20] sm:$0xff] %vm34, %v150
  %173 = vst.msk [vmem:[%s3 + $0x28] sm:$0xff] %vm34, %v155
  %174 = vst.msk [vmem:[%s3 + $0x30] sm:$0xff] %vm34, %v160
  %175 = vst.msk [vmem:[%s3 + $0x38] sm:$0xff] %vm34, %v165
  %v176 = vld [vmem:[%s0] sm:$0xff]
  %v177 = vld [vmem:[%s0 + $0x8] sm:$0xff]
  %v178 = vld [vmem:[%s0 + $0x10] sm:$0xff]
  %v179 = vld [vmem:[%s0 + $0x18] sm:$0xff]
  %v180 = vld [vmem:[%s0 + $0x20] sm:$0xff]
  %v181 = vld [vmem:[%s0 + $0x28] sm:$0xff]
  %v182 = vld [vmem:[%s0 + $0x30] sm:$0xff]
  %v183 = vld [vmem:[%s0 + $0x38] sm:$0xff]
  %vm184 = vcmask 23552
  %185 = vst.msk [vmem:[%s3] sm:$0xff] %vm184, %v176
  %186 = vst.msk [vmem:[%s3 + $0x8] sm:$0xff] %vm184, %v177
  %187 = vst.msk [vmem:[%s3 + $0x10] sm:$0xff] %vm184, %v178
  %188 = vst.msk [vmem:[%s3 + $0x18] sm:$0xff] %vm184, %v179
  %189 = vst.msk [vmem:[%s3 + $0x20] sm:$0xff] %vm184, %v180
  %190 = vst.msk [vmem:[%s3 + $0x28] sm:$0xff] %vm184, %v181
  %191 = vst.msk [vmem:[%s3 + $0x30] sm:$0xff] %vm184, %v182
  %192 = vst.msk [vmem:[%s3 + $0x38] sm:$0xff] %vm184, %v183
  // Predicated region
  $region14: #{pyg_linear_pass.1} parent=0 // pred_check
    _
  $region15: #{pyg_linear_pass.1} parent=0 // pred_check_branch
    %194 = sbr.rel (0) target = $region17
  $region16: #{pyg_linear_pass.1} parent=0 // pred_region
    _
  $region17: #{pyg_linear_pass.1} parent=0 // pred_fallthru
    _
  // Predicated region
  $region18: #{pyg_linear_pass.1} parent=0 // pred_check
    _
  $region19: #{pyg_linear_pass.1} parent=0 // pred_check_branch
    %196 = sbr.rel (0) target = $region21
  $region20: #{pyg_linear_pass.1} parent=0 // pred_region
    _
  $region21: #{pyg_linear_pass.1} parent=0 // pred_fallthru
    _

</llo_original>
